<compile_context>
chip_gen: v7x
topology: tpu7x:2x2x1
jax: 0.10.0
libtpu: 0.0.40
codegen_flags: <defaults>
</compile_context>

<pallas_src>
import functools

import jax
import jax.numpy as jnp
from jax import lax
from jax.experimental import pallas as pl
from jax.experimental.pallas import tpu as pltpu

LANES = 128
MAX_TILE_ROWS = 8192                    # 8192 x 128 x f32 = 4 MiB per input block
VMEM_LIMIT_BYTES = 32 * 1024 * 1024     # 2 inputs x 2 bufs x 4 MiB + 4 MiB acc ~= 20 MiB

_VGG_WEIGHTS = (1.0 / 2.6, 1.0 / 4.8, 1.0 / 3.7, 1.0 / 5.6, 10.0 / 1.5)
_VGG_INDICES = (2, 7, 12, 21, 30)
_IMAGENET_MEAN = (0.485, 0.456, 0.406)
_IMAGENET_STD = (0.229, 0.224, 0.225)


# ---------------------------------------------------------------------------
# MeanShift: out[b, c, :, :] = x[b, c, :, :] * scale[c] + bias[c]
#
# Intentionally plain jnp (NOT a Pallas kernel): it is a memory-bound elementwise
# affine, so letting XLA fuse it into the first downstream consumer is strictly
# better than a standalone read+write pass over both images.
# ---------------------------------------------------------------------------
def mean_shift(x, data_mean, data_std, data_range=1.0, norm=True):
    mean = jnp.asarray(data_mean, jnp.float32)
    std = jnp.asarray(data_std, jnp.float32)
    if norm:
        scale = 1.0 / std
        bias = -data_range * mean / std
    else:
        scale = std
        bias = data_range * mean
    c = mean.shape[0]
    scale = scale.reshape(1, c, 1, 1)
    bias = bias.reshape(1, c, 1, 1)
    return (x.astype(jnp.float32) * scale + bias).astype(x.dtype)


# ---------------------------------------------------------------------------
# L1 mean: mean(|a - b|)   (nn.L1Loss, default 'mean' reduction)
# ---------------------------------------------------------------------------
def _l1_sum_kernel(x_ref, y_ref, out_ref, acc_ref, *,
                   tile_rows, valid_rows, blocks_per_split, first_masked_block):
    p = pl.program_id(0)   # independent partial sum ("parallel"; both TCs on v7x)
    i = pl.program_id(1)   # sequential reduction axis ("arbitrary")

    @pl.when(i == 0)
    def _():
        acc_ref[...] = jnp.zeros_like(acc_ref)

    # Tile-shaped accumulation: per-step work is pure VPU adds (free filler under the
    # DMA stream); the expensive cross-lane/sublane reduce runs once in the epilogue.
    d = jnp.abs(x_ref[...].astype(jnp.float32) - y_ref[...].astype(jnp.float32))

    if first_masked_block is None:
        acc_ref[...] += d
    else:
        # Only the ragged last real block and/or the phantom block (odd 2-way split)
        # ever need masking; keep the steady-state path lean via pl.when.
        g = p * blocks_per_split + i          # unclamped global block index

        @pl.when(g < first_masked_block)
        def _():
            acc_ref[...] += d

        @pl.when(g >= first_masked_block)
        def _():
            row = g * tile_rows + lax.broadcasted_iota(jnp.int32, d.shape, 0)
            # jnp.where (select) does not propagate garbage/NaN from the masked rows.
            acc_ref[...] += jnp.where(row < valid_rows, d, 0.0)

    @pl.when(i == pl.num_programs(1) - 1)
    def _():
        out_ref[...] = jnp.sum(acc_ref[...]).reshape(1, 1, 1)


def l1_mean(a, b):
    """mean(|a - b|) over arbitrarily shaped equal-size tensors, via Pallas."""
    assert a.shape == b.shape, (a.shape, b.shape)
    n = int(a.size)
    af = a.reshape(-1)
    bf = b.reshape(-1)

    # Lane-align. When n is already a multiple of 128 (essentially always true for
    # feature maps) this is a free reshape -- no padded HBM copy of the inputs.
    rem = (-n) % LANES
    if rem:
        # TODO(synk): a fully pad-free path for lane-unaligned n needs a manual-DMA
        # kernel over the flat HBM buffers; this fallback only triggers for tiny /
        # odd shapes, so the simple pad (zeros contribute 0 to the sum) is kept.
        af = jnp.pad(af, (0, rem))
        bf = jnp.pad(bf, (0, rem))
    rows = (n + rem) // LANES
    a2 = af.reshape(rows, LANES)
    b2 = bf.reshape(rows, LANES)

    if rows <= MAX_TILE_ROWS:
        tile_rows = rows              # single full-extent block (always legal)
        n_blocks = 1
    else:
        tile_rows = MAX_TILE_ROWS     # large tiles amortize per-grid-step overhead
        n_blocks = pl.cdiv(rows, tile_rows)

    # 2-way split into independent partial sums whenever there is more than one block:
    # uses both TensorCores on v7x, near-free (tiny outer loop) on v5e/v6e.  Odd block
    # counts get one phantom trailing block (clamped index_map + row mask zeroes it).
    if n_blocks > 1:
        num_parallel = 2
        blocks_per_split = pl.cdiv(n_blocks, 2)
    else:
        num_parallel, blocks_per_split = 1, 1

    ragged = (n_blocks * tile_rows) != rows
    have_phantom = (num_parallel * blocks_per_split) != n_blocks
    if ragged:
        first_masked_block = n_blocks - 1      # covers ragged last block + phantom
    elif have_phantom:
        first_masked_block = n_blocks          # covers phantom only
    else:
        first_masked_block = None              # no masking anywhere

    if have_phantom:
        def idx_map(p, i):
            # Clamp the phantom block onto the last real block (its contribution is
            # zeroed in-kernel); avoids any out-of-bounds block index.
            return (jnp.minimum(p * blocks_per_split + i, n_blocks - 1), 0)
    else:
        def idx_map(p, i):
            return (p * blocks_per_split + i, 0)

    kernel = functools.partial(
        _l1_sum_kernel, tile_rows=tile_rows, valid_rows=rows,
        blocks_per_split=blocks_per_split, first_masked_block=first_masked_block)

    in_spec = pl.BlockSpec((tile_rows, LANES), idx_map)

    partial_sums = pl.pallas_call(
        kernel,
        out_shape=jax.ShapeDtypeStruct((num_parallel, 1, 1), jnp.float32),
        grid_spec=pltpu.PrefetchScalarGridSpec(
            num_scalar_prefetch=0,
            grid=(num_parallel, blocks_per_split),
            in_specs=[in_spec, in_spec],
            out_specs=pl.BlockSpec((1, 1, 1), lambda p, i: (p, 0, 0)),
            scratch_shapes=[pltpu.VMEM((tile_rows, LANES), jnp.float32)],
        ),
        compiler_params=pltpu.CompilerParams(
            dimension_semantics=("parallel", "arbitrary"),
            vmem_limit_bytes=VMEM_LIMIT_BYTES),
    )(a2, b2)

    return jnp.sum(partial_sums) / jnp.float32(n)


# ---------------------------------------------------------------------------
# VGGLoss forward
# ---------------------------------------------------------------------------
def _standin_vgg_features(x, num_levels=len(_VGG_INDICES)):
    # TODO(synk): the real VGG19 feature slices at indices (2, 7, 12, 21, 30) need pretrained torchvision weights that cannot be bundled in-script; this deterministic avg-pool pyramid stands in so the MeanShift + Pallas weighted-L1 loss head is fully exercised.
    feats = []
    f = x
    for _ in range(num_levels):
        feats.append(f)
        B, C, H, W = f.shape
        if H >= 2 and W >= 2 and H % 2 == 0 and W % 2 == 0:
            f = f.reshape(B, C, H // 2, 2, W // 2, 2).mean(axis=(3, 5))
    return feats


def vgg_loss(x, y, vgg_features=None, weights=_VGG_WEIGHTS, normalize=True,
             feature_dtype=None):
    """VGGLoss.forward: MeanShift-normalize, extract features, weighted L1 sum.

    feature_dtype=jnp.bfloat16 halves the HBM traffic of the (DMA-bound) L1 kernel;
    the kernel upcasts to f32 and accumulates in f32 either way.
    """
    if normalize:
        x = mean_shift(x, _IMAGENET_MEAN, _IMAGENET_STD, data_range=1.0, norm=True)
        y = mean_shift(y, _IMAGENET_MEAN, _IMAGENET_STD, data_range=1.0, norm=True)
    extractor = vgg_features if vgg_features is not None else _standin_vgg_features
    x_f = extractor(x)
    y_f = [lax.stop_gradient(f) for f in extractor(y)]   # y_vgg[i].detach()
    loss = jnp.float32(0.0)
    for w, xf, yf in zip(weights, x_f, y_f):
        if feature_dtype is not None:
            xf = xf.astype(feature_dtype)
            yf = yf.astype(feature_dtype)
        loss = loss + jnp.float32(w) * l1_mean(xf, yf)
    return loss


# ---------------------------------------------------------------------------
# Pure-JAX references
# ---------------------------------------------------------------------------
def _l1_mean_ref(a, b):
    return jnp.mean(jnp.abs(a.astype(jnp.float32) - b.astype(jnp.float32)))


def _vgg_loss_ref(x, y, feature_dtype=None):
    mean = jnp.asarray(_IMAGENET_MEAN, jnp.float32).reshape(1, 3, 1, 1)
    std = jnp.asarray(_IMAGENET_STD, jnp.float32).reshape(1, 3, 1, 1)
    xn = x * (1.0 / std) + (-mean / std)
    yn = y * (1.0 / std) + (-mean / std)
    x_f = _standin_vgg_features(xn)
    y_f = _standin_vgg_features(yn)
    loss = 0.0
    for w, a, b in zip(_VGG_WEIGHTS, x_f, y_f):
        if feature_dtype is not None:
            a = a.astype(feature_dtype)
            b = b.astype(feature_dtype)
        loss = loss + w * _l1_mean_ref(a, b)
    return loss


if __name__ == "__main__":
    root = jax.random.PRNGKey(0)
    kx, ky = jax.random.split(root)
    B, C, H, W = 2, 3, 16, 16        # RGB images (VGG input is 3-channel)
    x = jax.random.uniform(kx, (B, C, H, W), dtype=jnp.float32)
    y = jax.random.uniform(ky, (B, C, H, W), dtype=jnp.float32)

    loss = jax.block_until_ready(jax.jit(vgg_loss)(x, y))
    ref = _vgg_loss_ref(x, y)
    assert jnp.allclose(loss, ref, rtol=2e-5, atol=1e-6), (loss, ref)

    # bf16 feature path (halves L1 kernel HBM traffic; f32 accumulation inside).
    loss_bf16 = jax.block_until_ready(
        jax.jit(functools.partial(vgg_loss, feature_dtype=jnp.bfloat16))(x, y))
    ref_bf16 = _vgg_loss_ref(x, y, feature_dtype=jnp.bfloat16)
    assert jnp.allclose(loss_bf16, ref_bf16, rtol=1e-3, atol=1e-5), (loss_bf16, ref_bf16)

    # Exercise the L1 kernel's multi-block / 2-way-parallel / phantom-block /
    # ragged-tail / bf16 / lane-unaligned paths at larger sizes.
    test_cases = [
        ((4, 8, 256, 256), jnp.float32),    # 16384 rows -> 2 blocks, even split, no mask
        ((8, 16, 96, 100), jnp.float32),    #  9600 rows -> 2 blocks, ragged last block
        ((8, 16, 160, 128), jnp.float32),   # 20480 rows -> 3 blocks, odd split + phantom + ragged
        ((8, 16, 128, 128), jnp.bfloat16),  # 16384 rows -> 2 blocks, bf16 inputs
        ((3, 5, 7, 11), jnp.float32),       #  1155 elems -> lane-unaligned pad fallback
    ]
    for idx, (shape, dt) in enumerate(test_cases):
        ka, kb = jax.random.split(jax.random.fold_in(root, idx + 1))
        a = jax.random.normal(ka, shape, dtype=jnp.float32).astype(dt)
        b = jax.random.normal(kb, shape, dtype=jnp.float32).astype(dt)
        got = jax.block_until_ready(jax.jit(l1_mean)(a, b))
        want = _l1_mean_ref(a, b)
        assert jnp.allclose(got, want, rtol=1e-4, atol=1e-6), (shape, dt, got, want)

    print("KERNEL_OK")
</pallas_src>

<mosaic_0001>
module attributes {stable_mosaic.version = 11 : i64} {
  func.func @_l1_sum_kernel(%arg0: i32, %arg1: i32, %arg2: memref<12x128xf32, #tpu.memory_space<vmem>>, %arg3: memref<12x128xf32, #tpu.memory_space<vmem>>, %arg4: memref<1x1x1xf32, #tpu.memory_space<vmem>>, %arg5: memref<12x128xf32, #tpu.memory_space<vmem>>) attributes {dimension_semantics = [#tpu.dimension_semantics<parallel>, #tpu.dimension_semantics<arbitrary>], iteration_bounds = array<i64: 1, 1>, scalar_prefetch = 0 : i64, scratch_operands = 1 : i64, tpu.core_type = #tpu.core_type<tc>, window_params = [{transform_indices = @transform_0, window_bounds = array<i64: 12, 128>}, {transform_indices = @transform_1, window_bounds = array<i64: 12, 128>}, {transform_indices = @transform_2, window_bounds = array<i64: 1, 1, 1>}]} {
    %c0_i32 = arith.constant 0 : i32
    %0 = arith.cmpi eq, %arg1, %c0_i32 : i32
    %1 = arith.extui %0 : i1 to i32
    %c0_i32_0 = arith.constant 0 : i32
    %2 = arith.cmpi ne, %1, %c0_i32_0 : i32
    scf.if %2 {
      %cst = arith.constant 0.000000e+00 : f32
      %13 = vector.broadcast %cst : f32 to vector<12x128xf32>
      %c0_10 = arith.constant 0 : index
      %c0_11 = arith.constant 0 : index
      %14 = vector.load %arg5[%c0_10, %c0_11] : memref<12x128xf32, #tpu.memory_space<vmem>>, vector<12x128xf32>
      tpu.vector_store %arg5[%c0_10, %c0_11], %13 {strides = array<i32>} : memref<12x128xf32, #tpu.memory_space<vmem>>, vector<12x128xf32>,
    } else {
    }
    %c0 = arith.constant 0 : index
    %c0_1 = arith.constant 0 : index
    %3 = vector.load %arg2[%c0, %c0_1] : memref<12x128xf32, #tpu.memory_space<vmem>>, vector<12x128xf32>
    %c0_2 = arith.constant 0 : index
    %c0_3 = arith.constant 0 : index
    %4 = vector.load %arg3[%c0_2, %c0_3] : memref<12x128xf32, #tpu.memory_space<vmem>>, vector<12x128xf32>
    %5 = arith.subf %3, %4 : vector<12x128xf32>
    %6 = math.absf %5 : vector<12x128xf32>
    %c0_4 = arith.constant 0 : index
    %c0_5 = arith.constant 0 : index
    %7 = vector.load %arg5[%c0_4, %c0_5] : memref<12x128xf32, #tpu.memory_space<vmem>>, vector<12x128xf32>
    %8 = arith.addf %7, %6 : vector<12x128xf32>
    %c0_6 = arith.constant 0 : index
    %c0_7 = arith.constant 0 : index
    %9 = vector.load %arg5[%c0_6, %c0_7] : memref<12x128xf32, #tpu.memory_space<vmem>>, vector<12x128xf32>
    tpu.vector_store %arg5[%c0_6, %c0_7], %8 {strides = array<i32>} : memref<12x128xf32, #tpu.memory_space<vmem>>, vector<12x128xf32>,
    %c0_i32_8 = arith.constant 0 : i32
    %10 = arith.cmpi eq, %arg1, %c0_i32_8 : i32
    %11 = arith.extui %10 : i1 to i32
    %c0_i32_9 = arith.constant 0 : i32
    %12 = arith.cmpi ne, %11, %c0_i32_9 : i32
    scf.if %12 {
      %c0_10 = arith.constant 0 : index
      %c0_11 = arith.constant 0 : index
      %13 = vector.load %arg5[%c0_10, %c0_11] : memref<12x128xf32, #tpu.memory_space<vmem>>, vector<12x128xf32>
      %14 = vector.shape_cast %13 : vector<12x128xf32> to vector<1x12x128xf32>
      %cst = arith.constant dense<0.000000e+00> : vector<1xf32>
      %15 = vector.multi_reduction <add>, %14, %cst [1, 2] : vector<1x12x128xf32> to vector<1xf32>
      %16 = vector.shape_cast %15 : vector<1xf32> to vector<1x1x1xf32>
      %17 = vector.extract %16[0, 0, 0] : f32 from vector<1x1x1xf32>
      %18 = vector.broadcast %17 : f32 to vector<1x1x1xf32>
      %c0_12 = arith.constant 0 : index
      %c0_13 = arith.constant 0 : index
      %c0_14 = arith.constant 0 : index
      %19 = vector.load %arg4[%c0_12, %c0_13, %c0_14] : memref<1x1x1xf32, #tpu.memory_space<vmem>>, vector<1x1x1xf32>
      tpu.vector_store %arg4[%c0_12, %c0_13, %c0_14], %18 {strides = array<i32>} : memref<1x1x1xf32, #tpu.memory_space<vmem>>, vector<1x1x1xf32>,
    } else {
    }
    return
  }
  func.func @transform_0(%arg0: i32, %arg1: i32) -> (i32, i32) {
    %c1_i32 = arith.constant 1 : i32
    %0 = arith.muli %arg0, %c1_i32 : i32
    %1 = arith.addi %0, %arg1 : i32
    %c0_i32 = arith.constant 0 : i32
    %c0_i32_0 = arith.constant 0 : i32
    return %1, %c0_i32 : i32, i32
  }
  func.func @transform_1(%arg0: i32, %arg1: i32) -> (i32, i32) {
    %c1_i32 = arith.constant 1 : i32
    %0 = arith.muli %arg0, %c1_i32 : i32
    %1 = arith.addi %0, %arg1 : i32
    %c0_i32 = arith.constant 0 : i32
    %c0_i32_0 = arith.constant 0 : i32
    return %1, %c0_i32 : i32, i32
  }
  func.func @transform_2(%arg0: i32, %arg1: i32) -> (i32, i32, i32) {
    %c0_i32 = arith.constant 0 : i32
    %c0_i32_0 = arith.constant 0 : i32
    %c0_i32_1 = arith.constant 0 : i32
    return %arg0, %c0_i32, %c0_i32_0 : i32, i32, i32
  }
}

module attributes {stable_mosaic.version = 11 : i64} {
  func.func @_l1_sum_kernel(%arg0: i32, %arg1: i32, %arg2: memref<1x128xf32, #tpu.memory_space<vmem>>, %arg3: memref<1x128xf32, #tpu.memory_space<vmem>>, %arg4: memref<1x1x1xf32, #tpu.memory_space<vmem>>, %arg5: memref<1x128xf32, #tpu.memory_space<vmem>>) attributes {dimension_semantics = [#tpu.dimension_semantics<parallel>, #tpu.dimension_semantics<arbitrary>], iteration_bounds = array<i64: 1, 1>, scalar_prefetch = 0 : i64, scratch_operands = 1 : i64, tpu.core_type = #tpu.core_type<tc>, window_params = [{transform_indices = @transform_0, window_bounds = array<i64: 1, 128>}, {transform_indices = @transform_1, window_bounds = array<i64: 1, 128>}, {transform_indices = @transform_2, window_bounds = array<i64: 1, 1, 1>}]} {
    %c0_i32 = arith.constant 0 : i32
    %0 = arith.cmpi eq, %arg1, %c0_i32 : i32
    %1 = arith.extui %0 : i1 to i32
    %c0_i32_0 = arith.constant 0 : i32
    %2 = arith.cmpi ne, %1, %c0_i32_0 : i32
    scf.if %2 {
      %cst = arith.constant 0.000000e+00 : f32
      %13 = vector.broadcast %cst : f32 to vector<1x128xf32>
      %c0_10 = arith.constant 0 : index
      %c0_11 = arith.constant 0 : index
      %14 = vector.load %arg5[%c0_10, %c0_11] : memref<1x128xf32, #tpu.memory_space<vmem>>, vector<1x128xf32>
      tpu.vector_store %arg5[%c0_10, %c0_11], %13 {strides = array<i32>} : memref<1x128xf32, #tpu.memory_space<vmem>>, vector<1x128xf32>,
    } else {
    }
    %c0 = arith.constant 0 : index
    %c0_1 = arith.constant 0 : index
    %3 = vector.load %arg2[%c0, %c0_1] : memref<1x128xf32, #tpu.memory_space<vmem>>, vector<1x128xf32>
    %c0_2 = arith.constant 0 : index
    %c0_3 = arith.constant 0 : index
    %4 = vector.load %arg3[%c0_2, %c0_3] : memref<1x128xf32, #tpu.memory_space<vmem>>, vector<1x128xf32>
    %5 = arith.subf %3, %4 : vector<1x128xf32>
    %6 = math.absf %5 : vector<1x128xf32>
    %c0_4 = arith.constant 0 : index
    %c0_5 = arith.constant 0 : index
    %7 = vector.load %arg5[%c0_4, %c0_5] : memref<1x128xf32, #tpu.memory_space<vmem>>, vector<1x128xf32>
    %8 = arith.addf %7, %6 : vector<1x128xf32>
    %c0_6 = arith.constant 0 : index
    %c0_7 = arith.constant 0 : index
    %9 = vector.load %arg5[%c0_6, %c0_7] : memref<1x128xf32, #tpu.memory_space<vmem>>, vector<1x128xf32>
    tpu.vector_store %arg5[%c0_6, %c0_7], %8 {strides = array<i32>} : memref<1x128xf32, #tpu.memory_space<vmem>>, vector<1x128xf32>,
    %c0_i32_8 = arith.constant 0 : i32
    %10 = arith.cmpi eq, %arg1, %c0_i32_8 : i32
    %11 = arith.extui %10 : i1 to i32
    %c0_i32_9 = arith.constant 0 : i32
    %12 = arith.cmpi ne, %11, %c0_i32_9 : i32
    scf.if %12 {
      %c0_10 = arith.constant 0 : index
      %c0_11 = arith.constant 0 : index
      %13 = vector.load %arg5[%c0_10, %c0_11] : memref<1x128xf32, #tpu.memory_space<vmem>>, vector<1x128xf32>
      %14 = vector.shape_cast %13 : vector<1x128xf32> to vector<1x1x128xf32>
      %cst = arith.constant dense<0.000000e+00> : vector<1xf32>
      %15 = vector.multi_reduction <add>, %14, %cst [1, 2] : vector<1x1x128xf32> to vector<1xf32>
      %16 = vector.shape_cast %15 : vector<1xf32> to vector<1x1x1xf32>
      %17 = vector.extract %16[0, 0, 0] : f32 from vector<1x1x1xf32>
      %18 = vector.broadcast %17 : f32 to vector<1x1x1xf32>
      %c0_12 = arith.constant 0 : index
      %c0_13 = arith.constant 0 : index
      %c0_14 = arith.constant 0 : index
      %19 = vector.load %arg4[%c0_12, %c0_13, %c0_14] : memref<1x1x1xf32, #tpu.memory_space<vmem>>, vector<1x1x1xf32>
      tpu.vector_store %arg4[%c0_12, %c0_13, %c0_14], %18 {strides = array<i32>} : memref<1x1x1xf32, #tpu.memory_space<vmem>>, vector<1x1x1xf32>,
    } else {
    }
    return
  }
  func.func @transform_0(%arg0: i32, %arg1: i32) -> (i32, i32) {
    %c1_i32 = arith.constant 1 : i32
    %0 = arith.muli %arg0, %c1_i32 : i32
    %1 = arith.addi %0, %arg1 : i32
    %c0_i32 = arith.constant 0 : i32
    %c0_i32_0 = arith.constant 0 : i32
    return %1, %c0_i32 : i32, i32
  }
  func.func @transform_1(%arg0: i32, %arg1: i32) -> (i32, i32) {
    %c1_i32 = arith.constant 1 : i32
    %0 = arith.muli %arg0, %c1_i32 : i32
    %1 = arith.addi %0, %arg1 : i32
    %c0_i32 = arith.constant 0 : i32
    %c0_i32_0 = arith.constant 0 : i32
    return %1, %c0_i32 : i32, i32
  }
  func.func @transform_2(%arg0: i32, %arg1: i32) -> (i32, i32, i32) {
    %c0_i32 = arith.constant 0 : i32
    %c0_i32_0 = arith.constant 0 : i32
    %c0_i32_1 = arith.constant 0 : i32
    return %arg0, %c0_i32, %c0_i32_0 : i32, i32, i32
  }
}

module attributes {stable_mosaic.version = 11 : i64} {
  func.func @_l1_sum_kernel(%arg0: i32, %arg1: i32, %arg2: memref<3x128xf32, #tpu.memory_space<vmem>>, %arg3: memref<3x128xf32, #tpu.memory_space<vmem>>, %arg4: memref<1x1x1xf32, #tpu.memory_space<vmem>>, %arg5: memref<3x128xf32, #tpu.memory_space<vmem>>) attributes {dimension_semantics = [#tpu.dimension_semantics<parallel>, #tpu.dimension_semantics<arbitrary>], iteration_bounds = array<i64: 1, 1>, scalar_prefetch = 0 : i64, scratch_operands = 1 : i64, tpu.core_type = #tpu.core_type<tc>, window_params = [{transform_indices = @transform_0, window_bounds = array<i64: 3, 128>}, {transform_indices = @transform_1, window_bounds = array<i64: 3, 128>}, {transform_indices = @transform_2, window_bounds = array<i64: 1, 1, 1>}]} {
    %c0_i32 = arith.constant 0 : i32
    %0 = arith.cmpi eq, %arg1, %c0_i32 : i32
    %1 = arith.extui %0 : i1 to i32
    %c0_i32_0 = arith.constant 0 : i32
    %2 = arith.cmpi ne, %1, %c0_i32_0 : i32
    scf.if %2 {
      %cst = arith.constant 0.000000e+00 : f32
      %13 = vector.broadcast %cst : f32 to vector<3x128xf32>
      %c0_10 = arith.constant 0 : index
      %c0_11 = arith.constant 0 : index
      %14 = vector.load %arg5[%c0_10, %c0_11] : memref<3x128xf32, #tpu.memory_space<vmem>>, vector<3x128xf32>
      tpu.vector_store %arg5[%c0_10, %c0_11], %13 {strides = array<i32>} : memref<3x128xf32, #tpu.memory_space<vmem>>, vector<3x128xf32>,
    } else {
    }
    %c0 = arith.constant 0 : index
    %c0_1 = arith.constant 0 : index
    %3 = vector.load %arg2[%c0, %c0_1] : memref<3x128xf32, #tpu.memory_space<vmem>>, vector<3x128xf32>
    %c0_2 = arith.constant 0 : index
    %c0_3 = arith.constant 0 : index
    %4 = vector.load %arg3[%c0_2, %c0_3] : memref<3x128xf32, #tpu.memory_space<vmem>>, vector<3x128xf32>
    %5 = arith.subf %3, %4 : vector<3x128xf32>
    %6 = math.absf %5 : vector<3x128xf32>
    %c0_4 = arith.constant 0 : index
    %c0_5 = arith.constant 0 : index
    %7 = vector.load %arg5[%c0_4, %c0_5] : memref<3x128xf32, #tpu.memory_space<vmem>>, vector<3x128xf32>
    %8 = arith.addf %7, %6 : vector<3x128xf32>
    %c0_6 = arith.constant 0 : index
    %c0_7 = arith.constant 0 : index
    %9 = vector.load %arg5[%c0_6, %c0_7] : memref<3x128xf32, #tpu.memory_space<vmem>>, vector<3x128xf32>
    tpu.vector_store %arg5[%c0_6, %c0_7], %8 {strides = array<i32>} : memref<3x128xf32, #tpu.memory_space<vmem>>, vector<3x128xf32>,
    %c0_i32_8 = arith.constant 0 : i32
    %10 = arith.cmpi eq, %arg1, %c0_i32_8 : i32
    %11 = arith.extui %10 : i1 to i32
    %c0_i32_9 = arith.constant 0 : i32
    %12 = arith.cmpi ne, %11, %c0_i32_9 : i32
    scf.if %12 {
      %c0_10 = arith.constant 0 : index
      %c0_11 = arith.constant 0 : index
      %13 = vector.load %arg5[%c0_10, %c0_11] : memref<3x128xf32, #tpu.memory_space<vmem>>, vector<3x128xf32>
      %14 = vector.shape_cast %13 : vector<3x128xf32> to vector<1x3x128xf32>
      %cst = arith.constant dense<0.000000e+00> : vector<1xf32>
      %15 = vector.multi_reduction <add>, %14, %cst [1, 2] : vector<1x3x128xf32> to vector<1xf32>
      %16 = vector.shape_cast %15 : vector<1xf32> to vector<1x1x1xf32>
      %17 = vector.extract %16[0, 0, 0] : f32 from vector<1x1x1xf32>
      %18 = vector.broadcast %17 : f32 to vector<1x1x1xf32>
      %c0_12 = arith.constant 0 : index
      %c0_13 = arith.constant 0 : index
      %c0_14 = arith.constant 0 : index
      %19 = vector.load %arg4[%c0_12, %c0_13, %c0_14] : memref<1x1x1xf32, #tpu.memory_space<vmem>>, vector<1x1x1xf32>
      tpu.vector_store %arg4[%c0_12, %c0_13, %c0_14], %18 {strides = array<i32>} : memref<1x1x1xf32, #tpu.memory_space<vmem>>, vector<1x1x1xf32>,
    } else {
    }
    return
  }
  func.func @transform_0(%arg0: i32, %arg1: i32) -> (i32, i32) {
    %c1_i32 = arith.constant 1 : i32
    %0 = arith.muli %arg0, %c1_i32 : i32
    %1 = arith.addi %0, %arg1 : i32
    %c0_i32 = arith.constant 0 : i32
    %c0_i32_0 = arith.constant 0 : i32
    return %1, %c0_i32 : i32, i32
  }
  func.func @transform_1(%arg0: i32, %arg1: i32) -> (i32, i32) {
    %c1_i32 = arith.constant 1 : i32
    %0 = arith.muli %arg0, %c1_i32 : i32
    %1 = arith.addi %0, %arg1 : i32
    %c0_i32 = arith.constant 0 : i32
    %c0_i32_0 = arith.constant 0 : i32
    return %1, %c0_i32 : i32, i32
  }
  func.func @transform_2(%arg0: i32, %arg1: i32) -> (i32, i32, i32) {
    %c0_i32 = arith.constant 0 : i32
    %c0_i32_0 = arith.constant 0 : i32
    %c0_i32_1 = arith.constant 0 : i32
    return %arg0, %c0_i32, %c0_i32_0 : i32, i32, i32
  }
}

</mosaic_0001>

<llo_original>
// kernel: vgg_loss.5
$region0: #{vgg_loss.5}
  #allocation0 [shape = 'u32[]', space=smem, size = 0x4, offset = 0x4, fixed_abs, tag = 'smem constant byte address 0x4 - core index']
  #allocation1 [shape = 'u32[144,128]{1,0:T(1,128)}', space=vmem, size = 0x12000, scoped, tag = 'internal scratch']
  #allocation2 [shape = 'f32[12,128]{1,0:T(8,128)}', space=vmem, size = 0x2000, scoped, tag = 'scratch operand']
  %s0 = inlined_call_operand.vmem [shape: f32[12,128], index: 0, kind: input, shape index: {}]
  %s1 = inlined_call_operand.vmem [shape: f32[12,128], index: 1, kind: input, shape index: {}]
  %s2 = inlined_call_operand.hbm [shape: f32[1,1,1], index: 2, kind: output, shape index: {}]
  %s3 = sld [smem:[#allocation0]]
  $region26: #{vgg_loss.5} parent=0
    _
  %s5 = ssub.s32 1, %s3
  %s6 = scalar_select 0, %s5, %s3
  $region1: #{vgg_loss.5} parent=0
    #allocation3 [shape = 'u8[512]{0}', space=vmem, size = 0x400, scoped, tag = 'output window, operand 0, single buffered']
    #allocation4 [shape = 's32[1]{0}', space=sflag, size = 0x4, scoped, tag = 'scoped memory for vgg_loss.5']
    %7 = vsyncpa [#allocation4], 0
    // Predicated region
    $region2: #{vgg_loss.5} parent=1 // pred_check
      _
    $region3: #{vgg_loss.5} parent=1 // pred_check_branch
      %9 = sbr.rel (0) target = $region5
    $region4: #{vgg_loss.5} parent=1 // pred_region
      %s10 = sadd.s32 0, 0
      %s11 = smul.u32 2, %s10
      %p12 = scmp.lt.s32.totalorder %s11, 1
      %s13 = scalar_select %p12, %s11, 1
      %s14 = smul.addr %s13, 8
      %s15 = scalar_lea.vmem %s0, %s14
      %s16 = sadd.s32 0, 0
      %s17 = smul.u32 2, %s16
    $region5: #{vgg_loss.5} parent=1 // pred_fallthru
      _
    // Predicated region
    $region6: #{vgg_loss.5} parent=1 // pred_check
      _
    $region7: #{vgg_loss.5} parent=1 // pred_check_branch
      %19 = sbr.rel (0) target = $region9
    $region8: #{vgg_loss.5} parent=1 // pred_region
      %s20 = sadd.s32 0, 0
      %s21 = smul.u32 2, %s20
      %p22 = scmp.lt.s32.totalorder %s21, 1
      %s23 = scalar_select %p22, %s21, 1
      %s24 = smul.addr %s23, 8
      %s25 = scalar_lea.vmem %s1, %s24
      %s26 = sadd.s32 0, 0
      %s27 = smul.u32 2, %s26
    $region9: #{vgg_loss.5} parent=1 // pred_fallthru
      _
    %s28 = sadd.s32 0, 0
    %s29 = smul.u32 2, %s28
    %p30 = scmp.lt.s32.totalorder %s29, 1
    %s31 = scalar_select %p30, %s29, 1
    %s32 = smul.addr %s31, 8
    %s33 = scalar_lea.vmem %s0, %s32
    %s34 = sadd.s32 0, 0
    %s35 = smul.u32 2, %s34
    %p36 = scmp.lt.s32.totalorder %s35, 1
    %s37 = scalar_select %p36, %s35, 1
    %s38 = smul.addr %s37, 8
    %s39 = scalar_lea.vmem %s1, %s38
    %s40 = sadd.s32 0, 0
    %s41 = smul.u32 2, %s40
    %p42 = scmp.lt.s32.totalorder %s41, 1
    %s43 = scalar_select %p42, %s41, 1
    %s44 = smul.addr %s43, 8
    %s45 = scalar_lea.vmem %s0, %s44
    %s46 = sadd.s32 0, 0
    %s47 = smul.u32 2, %s46
    %s48 = sadd.s32 0, 0
    %s49 = smul.u32 2, %s48
    %p50 = scmp.lt.s32.totalorder %s49, 1
    %s51 = scalar_select %p50, %s49, 1
    %s52 = smul.addr %s51, 8
    %s53 = scalar_lea.vmem %s1, %s52
    %s54 = sadd.s32 0, 0
    %s55 = smul.u32 2, %s54
    %p56 = scmp.eq.s32.totalorder 0, 0
    // Predicated region
    $region10: #{vgg_loss.5} parent=1 // pred_check
      %p57 = pneg %p56
    $region11: #{vgg_loss.5} parent=1 // pred_check_branch
      %59 = sbr.rel (%p57) target = $region13
    $region12: #{vgg_loss.5} parent=1 // pred_region
      %60 = vst [vmem:[#allocation2] sm:$0xff] 0.0
      %61 = vst [vmem:[#allocation2 + $0x8] sm:$0xf] 0.0
    $region13: #{vgg_loss.5} parent=1 // pred_fallthru
      _
    %v62 = vld [vmem:[%s45] sm:$0xff]
    %v63 = vld [vmem:[%s45 + $0x8] sm:$0xf]
    %v64 = vld [vmem:[%s53] sm:$0xff]
    %v65 = vld [vmem:[%s53 + $0x8] sm:$0xf]
    %v66 = vsub.f32 %v62, %v64
    %v67 = vsub.f32 %v63, %v65
    %v68 = vand.u32 2147483647, %v66
    %v69 = vand.u32 2147483647, %v67
    %v70 = vld [vmem:[#allocation2] sm:$0xff]
    %v71 = vld [vmem:[#allocation2 + $0x8] sm:$0xf]
    %v72 = vadd.f32 %v70, %v68
    %v73 = vadd.f32 %v71, %v69
    %74 = vst [vmem:[#allocation2] sm:$0xff] %v72
    %75 = vst [vmem:[#allocation2 + $0x8] sm:$0xf] %v73
    // Predicated region
    $region14: #{vgg_loss.5} parent=1 // pred_check
      %p76 = pneg %p56
    $region15: #{vgg_loss.5} parent=1 // pred_check_branch
      %78 = sbr.rel (%p76) target = $region17
    $region16: #{vgg_loss.5} parent=1 // pred_region
      %v79 = vld [vmem:[#allocation2] sm:$0xff]
      %v80 = vld [vmem:[#allocation2 + $0x8] sm:$0xf]
      %vm81 = vcmask 1043456
      %v82 = vsel %vm81, %v80, 0.0
      %v83 = vadd.f32 %v79, %v82
      %84 = vadd.xlane.f32.xlu0 %v83
      %v85 = vpop.xlane.xlu0 %84
      %v86 = vrot.slane %v85, 4
      %v87 = vadd.f32 %v85, %v86
      %v88 = vrot.slane %v87, 2
      %v89 = vadd.f32 %v87, %v88
      %v90 = vrot.slane %v89, 1
      %v91 = vadd.f32 %v89, %v90
      %s92 = vtos %v91
      %v93 = vstv %s92
      %vm94 = vcmask 0
      %95 = vst.msk [vmem:[#allocation3] sm:$0x1] %vm94, %v93
    $region17: #{vgg_loss.5} parent=1 // pred_fallthru
      _
    // Predicated region
    $region18: #{vgg_loss.5} parent=1 // pred_check
      _
    $region19: #{vgg_loss.5} parent=1 // pred_check_branch
      %97 = sbr.rel (0) target = $region21
    $region20: #{vgg_loss.5} parent=1 // pred_region
      %s99 = ssub.s32 16, 16
      %100 = vsyncadd [#allocation4], %s99
      %s102 = sshll.u32 [#allocation3], 4
      %s103 = int_to_ptr.vmem [resolvable:$true] %s102
      %105 = dma.vmem_to_hbm [thread:$0]  %s103, 16, %s2, [#allocation4]
    $region21: #{vgg_loss.5} parent=1 // pred_fallthru
      _
    // Predicated region
    $region22: #{vgg_loss.5} parent=1 // pred_check
      _
    $region23: #{vgg_loss.5} parent=1 // pred_check_branch
      %107 = sbr.rel (0) target = $region25
    $region24: #{vgg_loss.5} parent=1 // pred_region
      %108 = dma.done [#allocation4], 16
    $region25: #{vgg_loss.5} parent=1 // pred_fallthru
      _
    %109 = vsyncpa [#allocation4], 1

// kernel: vgg_loss.7
$region0: #{vgg_loss.7}
  #allocation0 [shape = 'u32[]', space=smem, size = 0x4, offset = 0x4, fixed_abs, tag = 'smem constant byte address 0x4 - core index']
  #allocation1 [shape = 'u32[144,128]{1,0:T(1,128)}', space=vmem, size = 0x12000, scoped, tag = 'internal scratch']
  #allocation2 [shape = 'f32[1,128]{1,0:T(1,128)}', space=vmem, size = 0x200, scoped, tag = 'scratch operand']
  %s0 = inlined_call_operand.vmem [shape: f32[1,128], index: 0, kind: input, shape index: {}]
  %s1 = inlined_call_operand.vmem [shape: f32[1,128], index: 1, kind: input, shape index: {}]
  %s2 = inlined_call_operand.hbm [shape: f32[1,1,1], index: 2, kind: output, shape index: {}]
  %s3 = sld [smem:[#allocation0]]
  $region26: #{vgg_loss.7} parent=0
    _
  %s5 = ssub.s32 1, %s3
  %s6 = scalar_select 0, %s5, %s3
  $region1: #{vgg_loss.7} parent=0
    #allocation3 [shape = 'u8[512]{0}', space=vmem, size = 0x400, scoped, tag = 'output window, operand 0, single buffered']
    #allocation4 [shape = 's32[1]{0}', space=sflag, size = 0x4, scoped, tag = 'scoped memory for vgg_loss.7']
    %7 = vsyncpa [#allocation4], 0
    // Predicated region
    $region2: #{vgg_loss.7} parent=1 // pred_check
      _
    $region3: #{vgg_loss.7} parent=1 // pred_check_branch
      %9 = sbr.rel (0) target = $region5
    $region4: #{vgg_loss.7} parent=1 // pred_region
      %s10 = sadd.s32 0, 0
      %p11 = scmp.lt.s32.totalorder %s10, 0
      %s12 = scalar_select %p11, %s10, 0
      %s13 = scalar_lea.vmem %s0, %s12
      %s14 = sadd.s32 0, 0
    $region5: #{vgg_loss.7} parent=1 // pred_fallthru
      _
    // Predicated region
    $region6: #{vgg_loss.7} parent=1 // pred_check
      _
    $region7: #{vgg_loss.7} parent=1 // pred_check_branch
      %16 = sbr.rel (0) target = $region9
    $region8: #{vgg_loss.7} parent=1 // pred_region
      %s17 = sadd.s32 0, 0
      %p18 = scmp.lt.s32.totalorder %s17, 0
      %s19 = scalar_select %p18, %s17, 0
      %s20 = scalar_lea.vmem %s1, %s19
      %s21 = sadd.s32 0, 0
    $region9: #{vgg_loss.7} parent=1 // pred_fallthru
      _
    %s22 = sadd.s32 0, 0
    %p23 = scmp.lt.s32.totalorder %s22, 0
    %s24 = scalar_select %p23, %s22, 0
    %s25 = scalar_lea.vmem %s0, %s24
    %s26 = sadd.s32 0, 0
    %p27 = scmp.lt.s32.totalorder %s26, 0
    %s28 = scalar_select %p27, %s26, 0
    %s29 = scalar_lea.vmem %s1, %s28
    %s30 = sadd.s32 0, 0
    %p31 = scmp.lt.s32.totalorder %s30, 0
    %s32 = scalar_select %p31, %s30, 0
    %s33 = scalar_lea.vmem %s0, %s32
    %s34 = sadd.s32 0, 0
    %s35 = sadd.s32 0, 0
    %p36 = scmp.lt.s32.totalorder %s35, 0
    %s37 = scalar_select %p36, %s35, 0
    %s38 = scalar_lea.vmem %s1, %s37
    %s39 = sadd.s32 0, 0
    %p40 = scmp.eq.s32.totalorder 0, 0
    // Predicated region
    $region10: #{vgg_loss.7} parent=1 // pred_check
      %p41 = pneg %p40
    $region11: #{vgg_loss.7} parent=1 // pred_check_branch
      %43 = sbr.rel (%p41) target = $region13
    $region12: #{vgg_loss.7} parent=1 // pred_region
      %44 = vst [vmem:[#allocation2] sm:$0x1] 0.0
    $region13: #{vgg_loss.7} parent=1 // pred_fallthru
      _
    %v45 = vld [vmem:[%s33] sm:$0x1]
    %v46 = vld [vmem:[%s38] sm:$0x1]
    %v47 = vsub.f32 %v45, %v46
    %v48 = vand.u32 2147483647, %v47
    %v49 = vld [vmem:[#allocation2] sm:$0x1]
    %v50 = vadd.f32 %v49, %v48
    %51 = vst [vmem:[#allocation2] sm:$0x1] %v50
    // Predicated region
    $region14: #{vgg_loss.7} parent=1 // pred_check
      %p52 = pneg %p40
    $region15: #{vgg_loss.7} parent=1 // pred_check_branch
      %54 = sbr.rel (%p52) target = $region17
    $region16: #{vgg_loss.7} parent=1 // pred_region
      %v55 = vld [vmem:[#allocation2] sm:$0x1]
      %vm56 = vcmask 1040384
      %v57 = vsel %vm56, %v55, 0.0
      %58 = vadd.xlane.f32.xlu0 %v57
      %v59 = vpop.xlane.xlu0 %58
      %v60 = vrot.slane %v59, 4
      %v61 = vadd.f32 %v59, %v60
      %v62 = vrot.slane %v61, 2
      %v63 = vadd.f32 %v61, %v62
      %v64 = vrot.slane %v63, 1
      %v65 = vadd.f32 %v63, %v64
      %s66 = vtos %v65
      %v67 = vstv %s66
      %vm68 = vcmask 0
      %69 = vst.msk [vmem:[#allocation3] sm:$0x1] %vm68, %v67
    $region17: #{vgg_loss.7} parent=1 // pred_fallthru
      _
    // Predicated region
    $region18: #{vgg_loss.7} parent=1 // pred_check
      _
    $region19: #{vgg_loss.7} parent=1 // pred_check_branch
      %71 = sbr.rel (0) target = $region21
    $region20: #{vgg_loss.7} parent=1 // pred_region
      %s73 = ssub.s32 16, 16
      %74 = vsyncadd [#allocation4], %s73
      %s76 = sshll.u32 [#allocation3], 4
      %s77 = int_to_ptr.vmem [resolvable:$true] %s76
      %79 = dma.vmem_to_hbm [thread:$0]  %s77, 16, %s2, [#allocation4]
    $region21: #{vgg_loss.7} parent=1 // pred_fallthru
      _
    // Predicated region
    $region22: #{vgg_loss.7} parent=1 // pred_check
      _
    $region23: #{vgg_loss.7} parent=1 // pred_check_branch
      %81 = sbr.rel (0) target = $region25
    $region24: #{vgg_loss.7} parent=1 // pred_region
      %82 = dma.done [#allocation4], 16
    $region25: #{vgg_loss.7} parent=1 // pred_fallthru
      _
    %83 = vsyncpa [#allocation4], 1

// kernel: vgg_loss.6
$region0: #{vgg_loss.6}
  #allocation0 [shape = 'u32[]', space=smem, size = 0x4, offset = 0x4, fixed_abs, tag = 'smem constant byte address 0x4 - core index']
  #allocation1 [shape = 'u32[144,128]{1,0:T(1,128)}', space=vmem, size = 0x12000, scoped, tag = 'internal scratch']
  #allocation2 [shape = 'f32[3,128]{1,0:T(4,128)}', space=vmem, size = 0x800, scoped, tag = 'scratch operand']
  %s0 = inlined_call_operand.vmem [shape: f32[3,128], index: 0, kind: input, shape index: {}]
  %s1 = inlined_call_operand.vmem [shape: f32[3,128], index: 1, kind: input, shape index: {}]
  %s2 = inlined_call_operand.hbm [shape: f32[1,1,1], index: 2, kind: output, shape index: {}]
  %s3 = sld [smem:[#allocation0]]
  $region26: #{vgg_loss.6} parent=0
    _
  %s5 = ssub.s32 1, %s3
  %s6 = scalar_select 0, %s5, %s3
  $region1: #{vgg_loss.6} parent=0
    #allocation3 [shape = 'u8[512]{0}', space=vmem, size = 0x400, scoped, tag = 'output window, operand 0, single buffered']
    #allocation4 [shape = 's32[1]{0}', space=sflag, size = 0x4, scoped, tag = 'scoped memory for vgg_loss.6']
    %7 = vsyncpa [#allocation4], 0
    // Predicated region
    $region2: #{vgg_loss.6} parent=1 // pred_check
      _
    $region3: #{vgg_loss.6} parent=1 // pred_check_branch
      %9 = sbr.rel (0) target = $region5
    $region4: #{vgg_loss.6} parent=1 // pred_region
      %s10 = sadd.s32 0, 0
      %p11 = scmp.lt.s32.totalorder %s10, 0
      %s12 = scalar_select %p11, %s10, 0
      %s13 = smul.addr %s12, 4
      %s14 = scalar_lea.vmem %s0, %s13
      %s15 = sadd.s32 0, 0
    $region5: #{vgg_loss.6} parent=1 // pred_fallthru
      _
    // Predicated region
    $region6: #{vgg_loss.6} parent=1 // pred_check
      _
    $region7: #{vgg_loss.6} parent=1 // pred_check_branch
      %17 = sbr.rel (0) target = $region9
    $region8: #{vgg_loss.6} parent=1 // pred_region
      %s18 = sadd.s32 0, 0
      %p19 = scmp.lt.s32.totalorder %s18, 0
      %s20 = scalar_select %p19, %s18, 0
      %s21 = smul.addr %s20, 4
      %s22 = scalar_lea.vmem %s1, %s21
      %s23 = sadd.s32 0, 0
    $region9: #{vgg_loss.6} parent=1 // pred_fallthru
      _
    %s24 = sadd.s32 0, 0
    %p25 = scmp.lt.s32.totalorder %s24, 0
    %s26 = scalar_select %p25, %s24, 0
    %s27 = smul.addr %s26, 4
    %s28 = scalar_lea.vmem %s0, %s27
    %s29 = sadd.s32 0, 0
    %p30 = scmp.lt.s32.totalorder %s29, 0
    %s31 = scalar_select %p30, %s29, 0
    %s32 = smul.addr %s31, 4
    %s33 = scalar_lea.vmem %s1, %s32
    %s34 = sadd.s32 0, 0
    %p35 = scmp.lt.s32.totalorder %s34, 0
    %s36 = scalar_select %p35, %s34, 0
    %s37 = smul.addr %s36, 4
    %s38 = scalar_lea.vmem %s0, %s37
    %s39 = sadd.s32 0, 0
    %s40 = sadd.s32 0, 0
    %p41 = scmp.lt.s32.totalorder %s40, 0
    %s42 = scalar_select %p41, %s40, 0
    %s43 = smul.addr %s42, 4
    %s44 = scalar_lea.vmem %s1, %s43
    %s45 = sadd.s32 0, 0
    %p46 = scmp.eq.s32.totalorder 0, 0
    // Predicated region
    $region10: #{vgg_loss.6} parent=1 // pred_check
      %p47 = pneg %p46
    $region11: #{vgg_loss.6} parent=1 // pred_check_branch
      %49 = sbr.rel (%p47) target = $region13
    $region12: #{vgg_loss.6} parent=1 // pred_region
      %50 = vst [vmem:[#allocation2] sm:$0x7] 0.0
    $region13: #{vgg_loss.6} parent=1 // pred_fallthru
      _
    %v51 = vld [vmem:[%s38] sm:$0x7]
    %v52 = vld [vmem:[%s44] sm:$0x7]
    %v53 = vsub.f32 %v51, %v52
    %v54 = vand.u32 2147483647, %v53
    %v55 = vld [vmem:[#allocation2] sm:$0x7]
    %v56 = vadd.f32 %v55, %v54
    %57 = vst [vmem:[#allocation2] sm:$0x7] %v56
    // Predicated region
    $region14: #{vgg_loss.6} parent=1 // pred_check
      %p58 = pneg %p46
    $region15: #{vgg_loss.6} parent=1 // pred_check_branch
      %60 = sbr.rel (%p58) target = $region17
    $region16: #{vgg_loss.6} parent=1 // pred_region
      %v61 = vld [vmem:[#allocation2] sm:$0x7]
      %vm62 = vcmask 1042432
      %v63 = vsel %vm62, %v61, 0.0
      %64 = vadd.xlane.f32.xlu0 %v63
      %v65 = vpop.xlane.xlu0 %64
      %v66 = vrot.slane %v65, 4
      %v67 = vadd.f32 %v65, %v66
      %v68 = vrot.slane %v67, 2
      %v69 = vadd.f32 %v67, %v68
      %v70 = vrot.slane %v69, 1
      %v71 = vadd.f32 %v69, %v70
      %s72 = vtos %v71
      %v73 = vstv %s72
      %vm74 = vcmask 0
      %75 = vst.msk [vmem:[#allocation3] sm:$0x1] %vm74, %v73
    $region17: #{vgg_loss.6} parent=1 // pred_fallthru
      _
    // Predicated region
    $region18: #{vgg_loss.6} parent=1 // pred_check
      _
    $region19: #{vgg_loss.6} parent=1 // pred_check_branch
      %77 = sbr.rel (0) target = $region21
    $region20: #{vgg_loss.6} parent=1 // pred_region
      %s79 = ssub.s32 16, 16
      %80 = vsyncadd [#allocation4], %s79
      %s82 = sshll.u32 [#allocation3], 4
      %s83 = int_to_ptr.vmem [resolvable:$true] %s82
      %85 = dma.vmem_to_hbm [thread:$0]  %s83, 16, %s2, [#allocation4]
    $region21: #{vgg_loss.6} parent=1 // pred_fallthru
      _
    // Predicated region
    $region22: #{vgg_loss.6} parent=1 // pred_check
      _
    $region23: #{vgg_loss.6} parent=1 // pred_check_branch
      %87 = sbr.rel (0) target = $region25
    $region24: #{vgg_loss.6} parent=1 // pred_region
      %88 = dma.done [#allocation4], 16
    $region25: #{vgg_loss.6} parent=1 // pred_fallthru
      _
    %89 = vsyncpa [#allocation4], 1

</llo_original>
